<compile_context>
chip_gen: v7x
topology: tpu7x:2x2x1
jax: 0.10.0
libtpu: 0.0.40
codegen_flags: <defaults>
</compile_context>

<pallas_src>
import functools

import jax
import jax.numpy as jnp
from jax.experimental import pallas as pl
from jax.experimental.pallas import tpu as pltpu


def _aux_loss_kernel(x_ref, w2_ref, bd_ref, lab_ref, out_ref, *, tm, total_n):
    i = pl.program_id(0)

    # x tile, cast in VMEM (no extra HBM traffic).
    xf = x_ref[...].astype(jnp.float32)                      # (tm, 128)

    # Row logits, flash-style: (8,128) . (tm,128)^T -> (8, tm).  Rows 0/1 of w2
    # hold the two Linear weight rows, so s[0] = x.w0 and s[1] = x.w1 per row of
    # x, laid out along LANES (lane-dense).
    s = jax.lax.dot_general(
        w2_ref[...], xf,
        dimension_numbers=(((1,), (1,)), ((), ())),
        preferred_element_type=jnp.float32,
    )                                                        # (8, tm)

    # 2-class cross entropy:  d = l1 - l0,  loss = softplus((1 - 2y) * d)
    d = s[1:2, :] - s[0:1, :] + bd_ref[...]                  # (1, tm)
    sign = (1 - 2 * lab_ref[...]).astype(jnp.float32)        # (1, tm)
    z = sign * d
    loss = jnp.maximum(z, 0.0) + jnp.log(1.0 + jnp.exp(-jnp.abs(z)))  # (1, tm)

    # Mask the ragged tail (rows >= total_n contribute 0).
    col = i * tm + jax.lax.broadcasted_iota(jnp.int32, (1, tm), 1)
    loss = jnp.where(col < total_n, loss, 0.0)

    # Lane-dense partial sums: fold tm lanes into 128 and store one output row
    # per grid step (no cross-step accumulator, no cross-lane reduce in-kernel).
    part = loss[:, 0:128]
    for g in range(1, tm // 128):
        part = part + loss[:, g * 128:(g + 1) * 128]
    out_ref[...] = part                                      # (1, 128)


def aux_audio_loss(x, labels, weight, bias, *, tm=1024):
    """Mean 2-class cross entropy of Linear(128, 2)(x) against `labels`.

    x: (..., 128) float32/bfloat16; labels: (...) ints in {0, 1}.
    weight: (2, 128), bias: (2,)  (PyTorch nn.Linear convention).
    """
    # TODO(synk): nn.CrossEntropyLoss ignore_index (-100) is not handled; labels
    # are assumed to be valid class ids in {0, 1}.
    assert x.shape[-1] == 128, "feature dim must be 128"
    assert tm % 128 == 0 and tm >= 128

    x2 = x.reshape(-1, 128)                        # keep dtype: no HBM upcast
    lab = labels.reshape(1, -1).astype(jnp.int32)  # (1, N): lane-major labels
    n = x2.shape[0]

    if n < tm:
        # Tiny input: round the single tile up to a lane multiple and pad once
        # (cheap -- the whole input is < tm rows).  Large inputs never pad.
        tm_eff = ((n + 127) // 128) * 128
        if tm_eff > n:
            x2 = jnp.pad(x2, ((0, tm_eff - n), (0, 0)))
            lab = jnp.pad(lab, ((0, 0), (0, tm_eff - n)))
    else:
        tm_eff = tm

    nblocks = pl.cdiv(x2.shape[0], tm_eff)

    # Linear params: the two weight rows stacked into an (8,128) "q" tile for the
    # MXU; the bias enters only through its difference b1 - b0.
    w2 = jnp.zeros((8, 128), jnp.float32).at[0:2, :].set(weight.astype(jnp.float32))
    bd = (bias[1] - bias[0]).astype(jnp.float32).reshape(1, 1)

    kernel = functools.partial(_aux_loss_kernel, tm=tm_eff, total_n=n)

    x_bytes = x2.size * x2.dtype.itemsize
    cost = pl.CostEstimate(
        flops=int(2 * 8 * 128 * x2.shape[0] + 10 * x2.shape[0]),
        transcendentals=int(2 * x2.shape[0]),
        bytes_accessed=int(x_bytes + lab.size * 4 + nblocks * 128 * 4 + 8 * 128 * 4),
    )

    partials = pl.pallas_call(
        kernel,
        out_shape=jax.ShapeDtypeStruct((nblocks, 128), jnp.float32),
        grid_spec=pltpu.PrefetchScalarGridSpec(
            num_scalar_prefetch=0,
            grid=(nblocks,),
            in_specs=[
                pl.BlockSpec((tm_eff, 128), lambda i: (i, 0)),  # x rows (streamed)
                pl.BlockSpec((8, 128), lambda i: (0, 0)),       # weight rows
                pl.BlockSpec((1, 1), lambda i: (0, 0)),         # bias diff
                pl.BlockSpec((1, tm_eff), lambda i: (0, i)),    # labels (lane-major)
            ],
            out_specs=pl.BlockSpec((1, 128), lambda i: (i, 0)),  # per-block partials
        ),
        compiler_params=pltpu.CompilerParams(
            dimension_semantics=("parallel",),   # megacore-shardable on v7x
        ),
        cost_estimate=cost,
    )(x2, w2, bd, lab)

    return jnp.sum(partials) / jnp.float32(n)


def aux_audio_loss_ref(x, labels, weight, bias):
    x2 = x.reshape(-1, 128).astype(jnp.float32)
    lab = labels.reshape(-1).astype(jnp.int32)
    logits = x2 @ weight.astype(jnp.float32).T + bias.astype(jnp.float32)
    lse = jax.scipy.special.logsumexp(logits, axis=-1)
    picked = jnp.take_along_axis(logits, lab[:, None], axis=-1)[:, 0]
    return jnp.mean(lse - picked)


if __name__ == "__main__":
    key = jax.random.PRNGKey(0)
    k_x1, k_l1, k_x2, k_l2, k_w, k_b = jax.random.split(key, 6)

    # Deterministic synthetic Linear(128, 2) params (PyTorch-style shapes).
    bound = 1.0 / jnp.sqrt(128.0)
    weight = jax.random.uniform(k_w, (2, 128), jnp.float32, -bound, bound)
    bias = jax.random.uniform(k_b, (2,), jnp.float32, -bound, bound)

    # Case 1: small (batch=2, seq=8, hidden=128) -> single (padded) tile.
    x_small = jax.random.normal(k_x1, (2, 8, 128), dtype=jnp.float32)
    lab_small = jax.random.randint(k_l1, (2, 8), 0, 2, dtype=jnp.int32)
    got1 = jax.block_until_ready(aux_audio_loss(x_small, lab_small, weight, bias))
    ref1 = aux_audio_loss_ref(x_small, lab_small, weight, bias)
    assert jnp.allclose(got1, ref1, rtol=1e-4, atol=1e-4), (got1, ref1)

    # Case 2: multiple tiles + ragged tail (exercises cdiv grid + masking).
    x_big = jax.random.normal(k_x2, (3, 100, 128), dtype=jnp.float32)
    lab_big = jax.random.randint(k_l2, (3, 100), 0, 2, dtype=jnp.int32)
    got2 = jax.block_until_ready(aux_audio_loss(x_big, lab_big, weight, bias, tm=128))
    ref2 = aux_audio_loss_ref(x_big, lab_big, weight, bias)
    assert jnp.allclose(got2, ref2, rtol=1e-4, atol=1e-4), (got2, ref2)

    print("KERNEL_OK")
</pallas_src>

<mosaic_0001>
module attributes {stable_mosaic.version = 11 : i64} {
  func.func @_aux_loss_kernel(%arg0: i32, %arg1: memref<128x128xf32, #tpu.memory_space<vmem>>, %arg2: memref<8x128xf32, #tpu.memory_space<vmem>>, %arg3: memref<1x1xf32, #tpu.memory_space<vmem>>, %arg4: memref<1x128xi32, #tpu.memory_space<vmem>>, %arg5: memref<1x128xf32, #tpu.memory_space<vmem>>) attributes {dimension_semantics = [#tpu.dimension_semantics<parallel>], iteration_bounds = array<i64: 1>, scalar_prefetch = 0 : i64, scratch_operands = 0 : i64, tpu.core_type = #tpu.core_type<tc>, window_params = [{transform_indices = @transform_0, window_bounds = array<i64: 128, 128>}, {pipeline_mode = #tpu.pipeline_mode<synchronous>, transform_indices = @transform_1, window_bounds = array<i64: 8, 128>}, {pipeline_mode = #tpu.pipeline_mode<synchronous>, transform_indices = @transform_2, window_bounds = array<i64: 1, 1>}, {transform_indices = @transform_3, window_bounds = array<i64: 1, 128>}, {transform_indices = @transform_4, window_bounds = array<i64: 1, 128>}]} {
    %c0 = arith.constant 0 : index
    %c0_0 = arith.constant 0 : index
    %0 = vector.load %arg1[%c0, %c0_0] : memref<128x128xf32, #tpu.memory_space<vmem>>, vector<128x128xf32>
    %c0_1 = arith.constant 0 : index
    %c0_2 = arith.constant 0 : index
    %1 = vector.load %arg2[%c0_1, %c0_2] : memref<8x128xf32, #tpu.memory_space<vmem>>, vector<8x128xf32>
    %cst = arith.constant dense<0.000000e+00> : vector<8x128xf32>
    %2 = tpu.matmul %1, %0, %cst {dimension_numbers = #tpu.dot_dimension_numbers<[1], [1], [0], [0], [0, 0, 1, 0], [], []>} : vector<8x128xf32>, vector<128x128xf32>, vector<8x128xf32> -> vector<8x128xf32>
    %3 = vector.extract_strided_slice %2 {offsets = [1, 0], sizes = [1, 128], strides = [1, 1]} : vector<8x128xf32> to vector<1x128xf32>
    %4 = vector.extract_strided_slice %2 {offsets = [0, 0], sizes = [1, 128], strides = [1, 1]} : vector<8x128xf32> to vector<1x128xf32>
    %5 = arith.subf %3, %4 : vector<1x128xf32>
    %c0_3 = arith.constant 0 : index
    %c0_4 = arith.constant 0 : index
    %6 = vector.load %arg3[%c0_3, %c0_4] : memref<1x1xf32, #tpu.memory_space<vmem>>, vector<1x1xf32>
    %7 = vector.broadcast %6 : vector<1x1xf32> to vector<1x128xf32>
    %8 = arith.addf %5, %7 : vector<1x128xf32>
    %c0_5 = arith.constant 0 : index
    %c0_6 = arith.constant 0 : index
    %9 = vector.load %arg4[%c0_5, %c0_6] : memref<1x128xi32, #tpu.memory_space<vmem>>, vector<1x128xi32>
    %c2_i32 = arith.constant 2 : i32
    %10 = vector.broadcast %c2_i32 : i32 to vector<1x128xi32>
    %11 = arith.muli %10, %9 : vector<1x128xi32>
    %c1_i32 = arith.constant 1 : i32
    %12 = vector.broadcast %c1_i32 : i32 to vector<1x128xi32>
    %13 = arith.subi %12, %11 : vector<1x128xi32>
    %14 = arith.sitofp %13 : vector<1x128xi32> to vector<1x128xf32>
    %15 = arith.mulf %14, %8 : vector<1x128xf32>
    %cst_7 = arith.constant 0.000000e+00 : f32
    %16 = vector.broadcast %cst_7 : f32 to vector<1x128xf32>
    %17 = arith.maximumf %15, %16 : vector<1x128xf32>
    %18 = math.absf %15 : vector<1x128xf32>
    %cst_8 = arith.constant 0.000000e+00 : f32
    %19 = vector.broadcast %cst_8 : f32 to vector<1x128xf32>
    %20 = arith.subf %19, %18 : vector<1x128xf32>
    %21 = math.exp %20 : vector<1x128xf32>
    %cst_9 = arith.constant 1.000000e+00 : f32
    %22 = vector.broadcast %cst_9 : f32 to vector<1x128xf32>
    %23 = arith.addf %22, %21 : vector<1x128xf32>
    %24 = math.log %23 : vector<1x128xf32>
    %25 = arith.addf %17, %24 : vector<1x128xf32>
    %c128_i32 = arith.constant 128 : i32
    %26 = arith.muli %arg0, %c128_i32 : i32
    %27 = tpu.iota {dimensions = array<i32: 1>} : vector<1x128xi32>
    %28 = vector.broadcast %26 : i32 to vector<1x128xi32>
    %29 = arith.addi %28, %27 : vector<1x128xi32>
    %c16_i32 = arith.constant 16 : i32
    %30 = vector.broadcast %c16_i32 : i32 to vector<1x128xi32>
    %31 = arith.cmpi slt, %29, %30 : vector<1x128xi32>
    %cst_10 = arith.constant 0.000000e+00 : f32
    %32 = vector.broadcast %cst_10 : f32 to vector<1x128xf32>
    %33 = arith.select %31, %25, %32 : vector<1x128xi1>, vector<1x128xf32>
    %c0_11 = arith.constant 0 : index
    %c0_12 = arith.constant 0 : index
    %34 = vector.load %arg5[%c0_11, %c0_12] : memref<1x128xf32, #tpu.memory_space<vmem>>, vector<1x128xf32>
    tpu.vector_store %arg5[%c0_11, %c0_12], %33 {strides = array<i32>} : memref<1x128xf32, #tpu.memory_space<vmem>>, vector<1x128xf32>,
    return
  }
  func.func @transform_0(%arg0: i32) -> (i32, i32) {
    %c0_i32 = arith.constant 0 : i32
    %c0_i32_0 = arith.constant 0 : i32
    return %arg0, %c0_i32 : i32, i32
  }
  func.func @transform_1(%arg0: i32) -> (i32, i32) {
    %c0_i32 = arith.constant 0 : i32
    %c0_i32_0 = arith.constant 0 : i32
    %c0_i32_1 = arith.constant 0 : i32
    return %c0_i32, %c0_i32_0 : i32, i32
  }
  func.func @transform_2(%arg0: i32) -> (i32, i32) {
    %c0_i32 = arith.constant 0 : i32
    %c0_i32_0 = arith.constant 0 : i32
    %c0_i32_1 = arith.constant 0 : i32
    return %c0_i32, %c0_i32_0 : i32, i32
  }
  func.func @transform_3(%arg0: i32) -> (i32, i32) {
    %c0_i32 = arith.constant 0 : i32
    %c0_i32_0 = arith.constant 0 : i32
    return %c0_i32, %arg0 : i32, i32
  }
  func.func @transform_4(%arg0: i32) -> (i32, i32) {
    %c0_i32 = arith.constant 0 : i32
    %c0_i32_0 = arith.constant 0 : i32
    return %arg0, %c0_i32 : i32, i32
  }
}

</mosaic_0001>

<llo_original>
// kernel: tpu_custom_call.1
$region0: #{tpu_custom_call.1}
  #allocation0 [shape = 'u32[]', space=smem, size = 0x4, offset = 0x4, fixed_abs, tag = 'smem constant byte address 0x4 - core index']
  #allocation1 [shape = 'u32[144,128]{1,0:T(1,128)}', space=vmem, size = 0x12000, scoped, tag = 'internal scratch']
  #allocation2 [shape = 'f32[1,1]{1,0:T(1,128)S(1)}', space=vmem, size = 0x200, scoped, tag = 'scoped memory for tpu_custom_call.1']
  %s0 = inlined_call_operand.hbm [shape: f32[128,128], index: 0, kind: input, shape index: {}]
  %s1 = inlined_call_operand.hbm [shape: f32[8,128], index: 1, kind: input, shape index: {}]
  %s2 = inlined_call_operand.<no memory space> [shape: f32[1,1], index: 2, kind: input, shape index: {}]
  %s3 = inlined_call_operand.vmem [shape: s32[1,128], index: 3, kind: input, shape index: {}]
  %s4 = inlined_call_operand.hbm [shape: f32[1,128], index: 4, kind: output, shape index: {}]
  %s5 = sld [smem:[#allocation0]]
  $region34: #{tpu_custom_call.1} parent=0
    _
  %s7 = ssub.s32 1, %s5
  %s8 = scalar_select 0, %s7, %s5
  %v9 = vstv %s2
  %10 = vst [vmem:[#allocation2] sm:$0x1] %v9
  $region1: #{tpu_custom_call.1} parent=0
    #allocation3 [shape = 'u8[65536]{0}', space=vmem, size = 0x10000, scoped, tag = 'input window, operand 0, single buffered']
    #allocation4 [shape = 's32[1]{0}', space=sflag, size = 0x4, scoped, tag = 'scoped memory for tpu_custom_call.1']
    #allocation5 [shape = 's32[1]{0}', space=sflag, size = 0x4, scoped, tag = 'scoped memory for tpu_custom_call.1']
    #allocation6 [shape = 'u8[4096]{0}', space=vmem, size = 0x1000, scoped, tag = 'input window, operand 1, single buffered']
    #allocation7 [shape = 's32[1]{0}', space=sflag, size = 0x4, scoped, tag = 'scoped memory for tpu_custom_call.1']
    #allocation8 [shape = 'u8[512]{0}', space=vmem, size = 0x400, scoped, tag = 'output window, operand 0, single buffered']
    %11 = vsyncpa [#allocation4], 0
    %12 = vsyncpa [#allocation7], 0
    %13 = vsyncpa [#allocation5], 0
    // Predicated region
    $region2: #{tpu_custom_call.1} parent=1 // pred_check
      _
    $region3: #{tpu_custom_call.1} parent=1 // pred_check_branch
      %15 = sbr.rel (0) target = $region5
    $region4: #{tpu_custom_call.1} parent=1 // pred_region
      %s17 = ssub.s32 2048, 2048
      %18 = vsyncadd [#allocation4], %s17
      %s19 = sshll.u32 [#allocation3], 4
      %s20 = int_to_ptr.vmem [resolvable:$true] %s19
      %25 = dma.hbm_to_vmem [thread:$0]  %s0, 2048, %s20, [#allocation4], 128, 128, 8
    $region5: #{tpu_custom_call.1} parent=1 // pred_fallthru
      _
    // Predicated region
    $region6: #{tpu_custom_call.1} parent=1 // pred_check
      _
    $region7: #{tpu_custom_call.1} parent=1 // pred_check_branch
      %27 = sbr.rel (0) target = $region9
    $region8: #{tpu_custom_call.1} parent=1 // pred_region
      %s29 = ssub.s32 128, 128
      %30 = vsyncadd [#allocation7], %s29
      %s32 = sshll.u32 [#allocation6], 4
      %s33 = int_to_ptr.vmem [resolvable:$true] %s32
      %35 = dma.hbm_to_vmem [thread:$0]  %s1, 128, %s33, [#allocation7]
    $region9: #{tpu_custom_call.1} parent=1 // pred_fallthru
      _
    // Predicated region
    $region10: #{tpu_custom_call.1} parent=1 // pred_check
      _
    $region11: #{tpu_custom_call.1} parent=1 // pred_check_branch
      %37 = sbr.rel (0) target = $region13
    $region12: #{tpu_custom_call.1} parent=1 // pred_region
      _
    $region13: #{tpu_custom_call.1} parent=1 // pred_fallthru
      _
    // Predicated region
    $region14: #{tpu_custom_call.1} parent=1 // pred_check
      _
    $region15: #{tpu_custom_call.1} parent=1 // pred_check_branch
      %39 = sbr.rel (0) target = $region17
    $region16: #{tpu_custom_call.1} parent=1 // pred_region
      _
    $region17: #{tpu_custom_call.1} parent=1 // pred_fallthru
      _
    // Predicated region
    $region18: #{tpu_custom_call.1} parent=1 // pred_check
      _
    $region19: #{tpu_custom_call.1} parent=1 // pred_check_branch
      %41 = sbr.rel (0) target = $region21
    $region20: #{tpu_custom_call.1} parent=1 // pred_region
      %42 = dma.done [#allocation4], 2048
    $region21: #{tpu_custom_call.1} parent=1 // pred_fallthru
      _
    // Predicated region
    $region22: #{tpu_custom_call.1} parent=1 // pred_check
      _
    $region23: #{tpu_custom_call.1} parent=1 // pred_check_branch
      %44 = sbr.rel (0) target = $region25
    $region24: #{tpu_custom_call.1} parent=1 // pred_region
      %45 = dma.done [#allocation7], 128
    $region25: #{tpu_custom_call.1} parent=1 // pred_fallthru
      _
    %v46 = vld [vmem:[#allocation3] sm:$0xff]
    %v47 = vld [vmem:[#allocation3 + $0x8] sm:$0xff]
    %v48 = vld [vmem:[#allocation3 + $0x10] sm:$0xff]
    %v49 = vld [vmem:[#allocation3 + $0x18] sm:$0xff]
    %v50 = vld [vmem:[#allocation3 + $0x20] sm:$0xff]
    %v51 = vld [vmem:[#allocation3 + $0x28] sm:$0xff]
    %v52 = vld [vmem:[#allocation3 + $0x30] sm:$0xff]
    %v53 = vld [vmem:[#allocation3 + $0x38] sm:$0xff]
    %v54 = vld [vmem:[#allocation3 + $0x40] sm:$0xff]
    %v55 = vld [vmem:[#allocation3 + $0x48] sm:$0xff]
    %v56 = vld [vmem:[#allocation3 + $0x50] sm:$0xff]
    %v57 = vld [vmem:[#allocation3 + $0x58] sm:$0xff]
    %v58 = vld [vmem:[#allocation3 + $0x60] sm:$0xff]
    %v59 = vld [vmem:[#allocation3 + $0x68] sm:$0xff]
    %v60 = vld [vmem:[#allocation3 + $0x70] sm:$0xff]
    %v61 = vld [vmem:[#allocation3 + $0x78] sm:$0xff]
    %v62 = vld [vmem:[#allocation6] sm:$0xff]
    %63 = vmatprep.subr.mxu0 0.0
    %64 = vmatpush1.xpose.msra.mxu0 %v46
    %65 = vmatprep.subr.mxu0 0.0
    %66 = vmatpush1.xpose.msra.mxu0 %v47
    %67 = vmatprep.subr.mxu0 0.0
    %68 = vmatpush1.xpose.msra.mxu0 %v48
    %69 = vmatprep.subr.mxu0 0.0
    %70 = vmatpush1.xpose.msra.mxu0 %v49
    %71 = vmatprep.subr.mxu0 0.0
    %72 = vmatpush1.xpose.msra.mxu0 %v50
    %73 = vmatprep.subr.mxu0 0.0
    %74 = vmatpush1.xpose.msra.mxu0 %v51
    %75 = vmatprep.subr.mxu0 0.0
    %76 = vmatpush1.xpose.msra.mxu0 %v52
    %77 = vmatprep.subr.mxu0 0.0
    %78 = vmatpush1.xpose.msra.mxu0 %v53
    %79 = vmatprep.subr.mxu0 0.0
    %80 = vmatpush1.xpose.msra.mxu0 %v54
    %81 = vmatprep.subr.mxu0 0.0
    %82 = vmatpush1.xpose.msra.mxu0 %v55
    %83 = vmatprep.subr.mxu0 0.0
    %84 = vmatpush1.xpose.msra.mxu0 %v56
    %85 = vmatprep.subr.mxu0 0.0
    %86 = vmatpush1.xpose.msra.mxu0 %v57
    %87 = vmatprep.subr.mxu0 0.0
    %88 = vmatpush1.xpose.msra.mxu0 %v58
    %89 = vmatprep.subr.mxu0 0.0
    %90 = vmatpush1.xpose.msra.mxu0 %v59
    %91 = vmatprep.subr.mxu0 0.0
    %92 = vmatpush1.xpose.msra.mxu0 %v60
    %93 = vmatprep.subr.mxu0 0.0
    %94 = vmatpush1.xpose.msra.mxu0 %v61
    %95 = vmatprep.subr.mxu0 0.0
    %96 = vmatpush1.xpose.msra.mxu0 0.0
    %97 = vmatprep.subr.mxu0 0.0
    %98 = vmatpush1.xpose.msra.mxu0 0.0
    %99 = vmatprep.subr.mxu0 0.0
    %100 = vmatpush1.xpose.msra.mxu0 0.0
    %101 = vmatprep.subr.mxu0 0.0
    %102 = vmatpush1.xpose.msra.mxu0 0.0
    %103 = vmatprep.subr.mxu0 0.0
    %104 = vmatpush1.xpose.msra.mxu0 0.0
    %105 = vmatprep.subr.mxu0 0.0
    %106 = vmatpush1.xpose.msra.mxu0 0.0
    %107 = vmatprep.subr.mxu0 0.0
    %108 = vmatpush1.xpose.msra.mxu0 0.0
    %109 = vmatprep.subr.mxu0 0.0
    %110 = vmatpush1.xpose.msra.mxu0 0.0
    %111 = vmatprep.subr.mxu0 0.0
    %112 = vmatpush1.xpose.msra.mxu0 0.0
    %113 = vmatprep.subr.mxu0 0.0
    %114 = vmatpush1.xpose.msra.mxu0 0.0
    %115 = vmatprep.subr.mxu0 0.0
    %116 = vmatpush1.xpose.msra.mxu0 0.0
    %117 = vmatprep.subr.mxu0 0.0
    %118 = vmatpush1.xpose.msra.mxu0 0.0
    %119 = vmatprep.subr.mxu0 0.0
    %120 = vmatpush1.xpose.msra.mxu0 0.0
    %121 = vmatprep.subr.mxu0 0.0
    %122 = vmatpush1.xpose.msra.mxu0 0.0
    %123 = vmatprep.subr.mxu0 0.0
    %124 = vmatpush1.xpose.msra.mxu0 0.0
    %125 = vmatprep.subr.mxu0 0.0
    %126 = vmatpush1.xpose.msra.mxu0 0.0
    %127 = vmatprep.mubr.f32.mxu0 0.0
    %128 = vmatmul.mubr.f32.gmra.mrb[0].mxu0 %v62
    %v129 = vpop.f32.mrb[0].mxu0
    %v130 = vadd.f32 0.0, %v129
    %v131 = vpop.f32.mrb[0].mxu0
    %132 = vdwg.mxu0
    %v134 = vrot.slane %v130, 7
    %v136 = vsub.f32 %v130, %v134
    %v137 = vld [vmem:[#allocation2] sm:$0x1]
    %139 = vset.pattern.permute.xlu0 0
    %140 = vperm.xlu0 %139, %v137
    %v141 = vpop.permute.xlu0 %140
    %v143 = vlaneseq
    %v144 = vshrl.u32 %v143, 7
    %v145 = vsub.s32 0, %v144
    %v146 = vrot.slane %v141, %v145
    %v147 = vadd.f32 %v136, %v146
    %v148 = vld [vmem:[%s3] sm:$0x1]
    %v149 = vmul.u32 %v148, 2
    %v150 = vsub.s32 1, %v149
    %v151 = vcvt.s32.f32 %v150
    %v154 = vunpack.c.l.s4 1966171168
    %v155 = vunpack.c.0.s8 %v154
    %v156 = vlaneseq
    %v157 = vshrl.u32 %v156, 7
    %v158 = vsub.s32 %v155, %v157
    %v159 = vrot.slane %v147, %v158
    %v160 = vcombine.high %v159, %v159
    %v162 = vunpack.c.l.s4 1966171168
    %v163 = vunpack.c.0.s8 %v162
    %v164 = vlaneseq
    %v165 = vshrl.u32 %v164, 7
    %v166 = vsub.s32 %v163, %v165
    %v167 = vrot.slane %v160, %v166
    %v169 = vmul.f32 %v151, %v167
    %v170 = vmax.f32 %v169, 0.0
    %v171 = vand.u32 2147483647, %v169
    %v172 = vsub.f32 0.0, %v171
    %v173 = vmul.f32 %v172, 1.442695
    %v174 = vpow.pop %v173
    %v175 = vadd.f32 %v174, 1.0
    %v176 = vlog2.pop %v175
    %v177 = vmul.f32 %v176, 0.6931472
    %v178 = vadd.f32 %v170, %v177
    %s179 = smul.u32 0, 128
    %v180 = vlaneseq
    %v181 = vand.u32 %v180, 127
    %v182 = vstv %s179
    %v183 = vadd.s32 %v182, %v181
    %vm184 = vcmp.lt.s32.totalorder %v183, 16
    %v185 = vsel %vm184, %v178, 0.0
    %186 = vst [vmem:[#allocation8] sm:$0x1] %v185
    // Predicated region
    $region26: #{tpu_custom_call.1} parent=1 // pred_check
      _
    $region27: #{tpu_custom_call.1} parent=1 // pred_check_branch
      %188 = sbr.rel (0) target = $region29
    $region28: #{tpu_custom_call.1} parent=1 // pred_region
      %s190 = ssub.s32 16, 16
      %191 = vsyncadd [#allocation5], %s190
      %s193 = sshll.u32 [#allocation8], 4
      %s194 = int_to_ptr.vmem [resolvable:$true] %s193
      %196 = dma.vmem_to_hbm [thread:$0]  %s194, 16, %s4, [#allocation5]
    $region29: #{tpu_custom_call.1} parent=1 // pred_fallthru
      _
    // Predicated region
    $region30: #{tpu_custom_call.1} parent=1 // pred_check
      _
    $region31: #{tpu_custom_call.1} parent=1 // pred_check_branch
      %198 = sbr.rel (0) target = $region33
    $region32: #{tpu_custom_call.1} parent=1 // pred_region
      %199 = dma.done [#allocation5], 16
    $region33: #{tpu_custom_call.1} parent=1 // pred_fallthru
      _
    %200 = vsyncpa [#allocation4], 1
    %201 = vsyncpa [#allocation7], 1
    %202 = vsyncpa [#allocation5], 1

</llo_original>
